<compile_context>
chip_gen: v7x
topology: tpu7x:2x2x1
jax: 0.10.0
libtpu: 0.0.40
codegen_flags: <defaults>
</compile_context>

<pallas_src>
import functools

import jax
import jax.numpy as jnp
from jax import lax
from jax.experimental import pallas as pl
from jax.experimental.pallas import tpu as pltpu


# ----------------------------------------------------------------------------
# Pallas kernel: one image per grid step, channels-on-sublanes layout.
#   x_ref    : (Cin, HW)    f32   (block of x reshaped NCHW -> (N,Cin,HW))
#   mask_ref : (9, HW)      bf16  precomputed 3x3-tap boundary masks
#   w1_ref   : (P, Cin)     bf16  folded bn1/conv1/bn2
#   b1_ref   : (P, 1)       f32
#   w2_ref   : (P, 9*P)     bf16  folded conv2/bn3 (im2col-matmul form)
#   b2_ref   : (P, 1)       f32
#   w3_ref   : (Cout, P)    bf16  folded conv3/bn4/keep
#   b3_ref   : (Cout, 1)    f32
#   o_ref    : (Cout, HW)   f32
#   patch_ref: (9*P, HW)    bf16  VMEM scratch (im2col patch)
# ----------------------------------------------------------------------------
def bottleneck_kernel(x_ref, mask_ref, w1_ref, b1_ref, w2_ref, b2_ref,
                      w3_ref, b3_ref, o_ref, patch_ref, *, W, HW, P, Cin):
    f32 = jnp.float32
    bf16 = jnp.bfloat16

    xT = x_ref[...]                                    # (Cin, HW) f32
    x_bf = xT.astype(bf16)

    # --- stage 1: bn1 -> conv1(1x1) -> bn2 (folded) -> relu -----------------
    h1 = jnp.dot(w1_ref[...], x_bf, preferred_element_type=f32)   # (P, HW)
    h1 = jnp.maximum(h1 + b1_ref[...], 0.0)
    h1b = h1.astype(bf16)

    # --- stage 2: conv2(3x3, pad=1) -> bn3 (folded) -> relu -----------------
    # im2col via lane rolls; each tap is cast to bf16, masked with the
    # precomputed boundary mask and streamed into the bf16 scratch.
    k = 0
    for dy in (-1, 0, 1):
        for dx in (-1, 0, 1):
            s = dy * W + dx
            if s == 0:
                tap = h1b
            else:
                # tap[:, g] = h1[:, g + s]; wrap/out-of-image killed by mask.
                tap = pltpu.roll(h1, shift=(-s) % HW, axis=1).astype(bf16)
                tap = tap * mask_ref[k:k + 1, :]
            patch_ref[k * P:(k + 1) * P, :] = tap
            k += 1
    h2 = jnp.dot(w2_ref[...], patch_ref[...],
                 preferred_element_type=f32)                      # (P, HW)
    h2 = jnp.maximum(h2 + b2_ref[...], 0.0)

    # --- stage 3: conv3(1x1) -> bn4 -> shake_drop(eval) + f32 residual ------
    out = jnp.dot(w3_ref[...], h2.astype(bf16),
                  preferred_element_type=f32)                     # (Cout, HW)
    out = out + b3_ref[...]
    # zero-channel-padded shortcut: exact f32 VPU add on the first Cin rows.
    o_ref[:Cin, :] = out[:Cin, :] + xT
    o_ref[Cin:, :] = out[Cin:, :]


# ----------------------------------------------------------------------------
# Wrapper helpers
# ----------------------------------------------------------------------------
def prepare_kernel_params(params, *, Cin, P, Cout, keep):
    (s1, b1, w1, s2, b2, w2, s3, b3, w3, s4, b4) = params

    # conv1 block: relu(x @ W1f + B1f)
    W1f = (s1[:, None] * w1) * s2[None, :]             # (Cin, P)
    B1f = (b1 @ w1) * s2 + b2                          # (P,)

    # conv2 block: relu(im2col(r1) @ W2mat + b3); columns ordered k*P + i,
    # k = (dy+1)*3 + (dx+1) to match the in-kernel tap order.
    W2f = w2 * s3[None, None, None, :]                 # (3, 3, P, P) HWIO
    W2mat = jnp.transpose(W2f, (3, 0, 1, 2)).reshape(P, 9 * P)    # (P, 9P)
    B2f = b3                                           # (P,)

    # conv3 block (+ bn4 + shake-drop keep scale)
    W3f = w3 * (s4 * keep)[None, :]                    # (P, Cout)
    B3f = b4 * keep                                    # (Cout,)

    return (W1f.T.astype(jnp.bfloat16), B1f.reshape(P, 1),
            W2mat.astype(jnp.bfloat16), B2f.reshape(P, 1),
            W3f.T.astype(jnp.bfloat16), B3f.reshape(Cout, 1))


def make_tap_masks(H, W):
    """(9, H*W) bf16 masks: 1 where the (dy,dx) neighbour is inside the image."""
    HW = H * W
    yy = jnp.arange(HW, dtype=jnp.int32) // W
    xx = jnp.arange(HW, dtype=jnp.int32) % W
    rows = []
    for dy in (-1, 0, 1):
        for dx in (-1, 0, 1):
            valid = ((yy + dy >= 0) & (yy + dy < H) &
                     (xx + dx >= 0) & (xx + dx < W))
            rows.append(valid)
    return jnp.stack(rows, axis=0).astype(jnp.bfloat16)


def _const_spec(arr):
    zeros = (0,) * arr.ndim
    return pl.BlockSpec(arr.shape, lambda n, _z=zeros: _z)


def _vmem_limit_bytes(Cin, P, Cout, HW):
    # per-step pipelined blocks (double-buffered) + scratch + live temps
    blocks = (Cin * HW * 4 + Cout * HW * 4 + 9 * HW * 2
              + (P * Cin + 9 * P * P + Cout * P) * 2 + (2 * P + Cout) * 4)
    scratch = 9 * P * HW * 2
    temps = 6 * P * HW * 4 + Cout * HW * 4
    need = 2 * blocks + scratch + temps
    return int(min(max(4 * need, 8 << 20), 100 << 20))


def bottleneck_forward(x, params, *, planes, p_shakedrop):
    N, Cin, H, W = x.shape            # NCHW like the PyTorch module
    P = planes
    Cout = 4 * planes
    HW = H * W
    keep = float(1.0 - p_shakedrop)

    W1T, B1, W2T, B2, W3T, B3 = prepare_kernel_params(
        params, Cin=Cin, P=P, Cout=Cout, keep=keep)
    masks = make_tap_masks(H, W)

    # Free contiguous reshape (no data movement): NCHW -> (N, Cin, HW).
    x3 = x.reshape(N, Cin, HW)

    kernel = functools.partial(bottleneck_kernel, W=W, HW=HW, P=P, Cin=Cin)
    args = (x3, masks, W1T, B1, W2T, B2, W3T, B3)

    in_specs = [pl.BlockSpec((None, Cin, HW), lambda n: (n, 0, 0))]
    in_specs += [_const_spec(a) for a in args[1:]]

    grid_spec = pltpu.PrefetchScalarGridSpec(
        num_scalar_prefetch=0,
        grid=(N,),
        in_specs=in_specs,
        out_specs=pl.BlockSpec((None, Cout, HW), lambda n: (n, 0, 0)),
        scratch_shapes=[pltpu.VMEM((9 * P, HW), jnp.bfloat16)],
    )

    flops = 2 * N * HW * (Cin * P + 9 * P * P + P * Cout)
    bytes_accessed = (N * HW * (Cin + Cout) * 4
                      + (P * Cin + 9 * P * P + Cout * P) * 2
                      + 9 * HW * 2 + (2 * P + Cout) * 4)
    cost = pl.CostEstimate(flops=flops, transcendentals=0,
                           bytes_accessed=int(bytes_accessed))

    out3 = pl.pallas_call(
        kernel,
        out_shape=jax.ShapeDtypeStruct((N, Cout, HW), jnp.float32),
        grid_spec=grid_spec,
        compiler_params=pltpu.CompilerParams(
            dimension_semantics=("parallel",),
            vmem_limit_bytes=_vmem_limit_bytes(Cin, P, Cout, HW)),
        cost_estimate=cost,
    )(*args)

    return out3.reshape(N, Cout, H, W)


# ----------------------------------------------------------------------------
# Deterministic parameter construction (BatchNorm folded to scale/bias).
# ----------------------------------------------------------------------------
def fold_bn(gamma, beta, mean, var, eps=1e-5):
    scale = gamma / jnp.sqrt(var + eps)
    bias = beta - mean * scale
    return scale, bias


def make_bn(key, c):
    k1, k2, k3, k4 = jax.random.split(key, 4)
    gamma = jax.random.uniform(k1, (c,), jnp.float32, 0.5, 1.5)
    beta = 0.1 * jax.random.normal(k2, (c,), jnp.float32)
    mean = 0.1 * jax.random.normal(k3, (c,), jnp.float32)
    var = jax.random.uniform(k4, (c,), jnp.float32, 0.5, 1.5)
    return fold_bn(gamma, beta, mean, var)


def make_params(key, inplanes, planes):
    Cout = 4 * planes
    keys = jax.random.split(key, 7)
    s1, b1 = make_bn(keys[0], inplanes)
    s2, b2 = make_bn(keys[1], planes)
    s3, b3 = make_bn(keys[2], planes)
    s4, b4 = make_bn(keys[3], Cout)
    # conv weights: 1x1 as (Cin, Cout) matrices, 3x3 as HWIO (3, 3, Cin, Cout)
    w1 = jax.random.normal(keys[4], (inplanes, planes), jnp.float32)
    w1 = w1 / jnp.sqrt(float(inplanes))
    w2 = jax.random.normal(keys[5], (3, 3, planes, planes), jnp.float32)
    w2 = w2 / jnp.sqrt(float(9 * planes))
    w3 = jax.random.normal(keys[6], (planes, Cout), jnp.float32)
    w3 = w3 / jnp.sqrt(float(planes))
    return (s1, b1, w1, s2, b2, w2, s3, b3, w3, s4, b4)


# ----------------------------------------------------------------------------
# Pure-JAX reference (unfused, f32) for correctness check.  NCHW in/out.
# ----------------------------------------------------------------------------
def reference(x_nchw, params, *, planes, p_shakedrop):
    (s1, b1, w1, s2, b2, w2, s3, b3, w3, s4, b4) = params
    x = jnp.transpose(x_nchw, (0, 2, 3, 1))          # NHWC
    N, H, W, Cin = x.shape
    Cout = 4 * planes
    h = x * s1 + b1
    h = jnp.einsum('nhwc,cp->nhwp', h, w1)
    h = jnp.maximum(h * s2 + b2, 0.0)
    h = lax.conv_general_dilated(
        h, w2, window_strides=(1, 1), padding='SAME',
        dimension_numbers=('NHWC', 'HWIO', 'NHWC'))
    h = jnp.maximum(h * s3 + b3, 0.0)
    h = jnp.einsum('nhwp,pq->nhwq', h, w3)
    h = h * s4 + b4
    h = h * (1.0 - p_shakedrop)
    sc = jnp.pad(x, ((0, 0), (0, 0), (0, 0), (0, Cout - Cin)))
    out = h + sc
    return jnp.transpose(out, (0, 3, 1, 2))          # NCHW


if __name__ == "__main__":
    key = jax.random.PRNGKey(0)
    kx, kp = jax.random.split(key)

    # Small shapes consistent with the module (NCHW like PyTorch).
    N, H, W = 2, 16, 16
    inplanes, planes = 16, 8          # residual channels = 4 * planes = 32
    p_shakedrop = 0.5                 # eval-mode ShakeDrop scale = 0.5

    x = jax.random.normal(kx, (N, inplanes, H, W), jnp.float32)
    params = make_params(kp, inplanes, planes)

    out = bottleneck_forward(x, params, planes=planes, p_shakedrop=p_shakedrop)
    out = jax.block_until_ready(out)

    ref = reference(x, params, planes=planes, p_shakedrop=p_shakedrop)
    assert out.shape == (N, 4 * planes, H, W), out.shape
    # bf16 matmul operands (f32 accumulation, exact f32 residual add).
    assert jnp.allclose(out, ref, rtol=5e-2, atol=5e-2), (
        "max abs diff %g" % float(jnp.max(jnp.abs(out - ref))))

    print("KERNEL_OK")
</pallas_src>

<mosaic_0001>
module attributes {stable_mosaic.version = 11 : i64} {
  func.func @bottleneck_kernel(%arg0: i32, %arg1: memref<1x16x256xf32, #tpu.memory_space<vmem>>, %arg2: memref<9x256xbf16, #tpu.memory_space<vmem>>, %arg3: memref<8x16xbf16, #tpu.memory_space<vmem>>, %arg4: memref<8x1xf32, #tpu.memory_space<vmem>>, %arg5: memref<8x72xbf16, #tpu.memory_space<vmem>>, %arg6: memref<8x1xf32, #tpu.memory_space<vmem>>, %arg7: memref<32x8xbf16, #tpu.memory_space<vmem>>, %arg8: memref<32x1xf32, #tpu.memory_space<vmem>>, %arg9: memref<1x32x256xf32, #tpu.memory_space<vmem>>, %arg10: memref<72x256xbf16, #tpu.memory_space<vmem>>) attributes {dimension_semantics = [#tpu.dimension_semantics<parallel>], iteration_bounds = array<i64: 2>, scalar_prefetch = 0 : i64, scratch_operands = 1 : i64, tpu.core_type = #tpu.core_type<tc>, window_params = [{transform_indices = @transform_0, window_bounds = array<i64: 1, 16, 256>}, {pipeline_mode = #tpu.pipeline_mode<synchronous>, transform_indices = @transform_1, window_bounds = array<i64: 9, 256>}, {pipeline_mode = #tpu.pipeline_mode<synchronous>, transform_indices = @transform_2, window_bounds = array<i64: 8, 16>}, {pipeline_mode = #tpu.pipeline_mode<synchronous>, transform_indices = @transform_3, window_bounds = array<i64: 8, 1>}, {pipeline_mode = #tpu.pipeline_mode<synchronous>, transform_indices = @transform_4, window_bounds = array<i64: 8, 72>}, {pipeline_mode = #tpu.pipeline_mode<synchronous>, transform_indices = @transform_5, window_bounds = array<i64: 8, 1>}, {pipeline_mode = #tpu.pipeline_mode<synchronous>, transform_indices = @transform_6, window_bounds = array<i64: 32, 8>}, {pipeline_mode = #tpu.pipeline_mode<synchronous>, transform_indices = @transform_7, window_bounds = array<i64: 32, 1>}, {transform_indices = @transform_8, window_bounds = array<i64: 1, 32, 256>}]} {
    %c0 = arith.constant 0 : index
    %c0_0 = arith.constant 0 : index
    %c0_1 = arith.constant 0 : index
    %0 = vector.load %arg1[%c0, %c0_0, %c0_1] : memref<1x16x256xf32, #tpu.memory_space<vmem>>, vector<1x16x256xf32>
    %1 = vector.shape_cast %0 : vector<1x16x256xf32> to vector<16x256xf32>
    %2 = arith.truncf %1 : vector<16x256xf32> to vector<16x256xbf16>
    %c0_2 = arith.constant 0 : index
    %c0_3 = arith.constant 0 : index
    %3 = vector.load %arg3[%c0_2, %c0_3] : memref<8x16xbf16, #tpu.memory_space<vmem>>, vector<8x16xbf16>
    %cst = arith.constant dense<0.000000e+00> : vector<8x256xf32>
    %4 = tpu.matmul %3, %2, %cst {dimension_numbers = #tpu.dot_dimension_numbers<[1], [0], [0], [1], [0, 0, 1, 1], [], []>} : vector<8x16xbf16>, vector<16x256xbf16>, vector<8x256xf32> -> vector<8x256xf32>
    %c0_4 = arith.constant 0 : index
    %c0_5 = arith.constant 0 : index
    %5 = vector.load %arg4[%c0_4, %c0_5] : memref<8x1xf32, #tpu.memory_space<vmem>>, vector<8x1xf32>
    %6 = vector.broadcast %5 : vector<8x1xf32> to vector<8x256xf32>
    %7 = arith.addf %4, %6 : vector<8x256xf32>
    %cst_6 = arith.constant 0.000000e+00 : f32
    %8 = vector.broadcast %cst_6 : f32 to vector<8x256xf32>
    %9 = arith.maximumf %7, %8 : vector<8x256xf32>
    %10 = arith.truncf %9 : vector<8x256xf32> to vector<8x256xbf16>
    %c17_i32 = arith.constant 17 : i32
    %11 = tpu.dynamic_rotate %9 by %c17_i32 dim 1 : vector<8x256xf32>, i32 -> vector<8x256xf32>
    %12 = arith.truncf %11 : vector<8x256xf32> to vector<8x256xbf16>
    %c0_7 = arith.constant 0 : index
    %c0_8 = arith.constant 0 : index
    %13 = vector.load %arg2[%c0_7, %c0_8] : memref<9x256xbf16, #tpu.memory_space<vmem>>, vector<1x256xbf16>
    %14 = vector.broadcast %13 : vector<1x256xbf16> to vector<8x256xbf16>
    %15 = arith.mulf %12, %14 : vector<8x256xbf16>
    %c0_9 = arith.constant 0 : index
    %c0_10 = arith.constant 0 : index
    %16 = vector.load %arg10[%c0_9, %c0_10] : memref<72x256xbf16, #tpu.memory_space<vmem>>, vector<8x256xbf16>
    tpu.vector_store %arg10[%c0_9, %c0_10], %15 {strides = array<i32>} : memref<72x256xbf16, #tpu.memory_space<vmem>>, vector<8x256xbf16>,
    %c16_i32 = arith.constant 16 : i32
    %17 = tpu.dynamic_rotate %9 by %c16_i32 dim 1 : vector<8x256xf32>, i32 -> vector<8x256xf32>
    %18 = arith.truncf %17 : vector<8x256xf32> to vector<8x256xbf16>
    %c1 = arith.constant 1 : index
    %c0_11 = arith.constant 0 : index
    %19 = vector.load %arg2[%c1, %c0_11] : memref<9x256xbf16, #tpu.memory_space<vmem>>, vector<1x256xbf16>
    %20 = vector.broadcast %19 : vector<1x256xbf16> to vector<8x256xbf16>
    %21 = arith.mulf %18, %20 : vector<8x256xbf16>
    %c8 = arith.constant 8 : index
    %c0_12 = arith.constant 0 : index
    %22 = vector.load %arg10[%c8, %c0_12] : memref<72x256xbf16, #tpu.memory_space<vmem>>, vector<8x256xbf16>
    tpu.vector_store %arg10[%c8, %c0_12], %21 {strides = array<i32>} : memref<72x256xbf16, #tpu.memory_space<vmem>>, vector<8x256xbf16>,
    %c15_i32 = arith.constant 15 : i32
    %23 = tpu.dynamic_rotate %9 by %c15_i32 dim 1 : vector<8x256xf32>, i32 -> vector<8x256xf32>
    %24 = arith.truncf %23 : vector<8x256xf32> to vector<8x256xbf16>
    %c2 = arith.constant 2 : index
    %c0_13 = arith.constant 0 : index
    %25 = vector.load %arg2[%c2, %c0_13] : memref<9x256xbf16, #tpu.memory_space<vmem>>, vector<1x256xbf16>
    %26 = vector.broadcast %25 : vector<1x256xbf16> to vector<8x256xbf16>
    %27 = arith.mulf %24, %26 : vector<8x256xbf16>
    %c16 = arith.constant 16 : index
    %c0_14 = arith.constant 0 : index
    %28 = vector.load %arg10[%c16, %c0_14] : memref<72x256xbf16, #tpu.memory_space<vmem>>, vector<8x256xbf16>
    tpu.vector_store %arg10[%c16, %c0_14], %27 {strides = array<i32>} : memref<72x256xbf16, #tpu.memory_space<vmem>>, vector<8x256xbf16>,
    %c1_i32 = arith.constant 1 : i32
    %29 = tpu.dynamic_rotate %9 by %c1_i32 dim 1 : vector<8x256xf32>, i32 -> vector<8x256xf32>
    %30 = arith.truncf %29 : vector<8x256xf32> to vector<8x256xbf16>
    %c3 = arith.constant 3 : index
    %c0_15 = arith.constant 0 : index
    %31 = vector.load %arg2[%c3, %c0_15] : memref<9x256xbf16, #tpu.memory_space<vmem>>, vector<1x256xbf16>
    %32 = vector.broadcast %31 : vector<1x256xbf16> to vector<8x256xbf16>
    %33 = arith.mulf %30, %32 : vector<8x256xbf16>
    %c24 = arith.constant 24 : index
    %c0_16 = arith.constant 0 : index
    %34 = vector.load %arg10[%c24, %c0_16] : memref<72x256xbf16, #tpu.memory_space<vmem>>, vector<8x256xbf16>
    tpu.vector_store %arg10[%c24, %c0_16], %33 {strides = array<i32>} : memref<72x256xbf16, #tpu.memory_space<vmem>>, vector<8x256xbf16>,
    %c32 = arith.constant 32 : index
    %c0_17 = arith.constant 0 : index
    %35 = vector.load %arg10[%c32, %c0_17] : memref<72x256xbf16, #tpu.memory_space<vmem>>, vector<8x256xbf16>
    tpu.vector_store %arg10[%c32, %c0_17], %10 {strides = array<i32>} : memref<72x256xbf16, #tpu.memory_space<vmem>>, vector<8x256xbf16>,
    %c255_i32 = arith.constant 255 : i32
    %36 = tpu.dynamic_rotate %9 by %c255_i32 dim 1 : vector<8x256xf32>, i32 -> vector<8x256xf32>
    %37 = arith.truncf %36 : vector<8x256xf32> to vector<8x256xbf16>
    %c5 = arith.constant 5 : index
    %c0_18 = arith.constant 0 : index
    %38 = vector.load %arg2[%c5, %c0_18] : memref<9x256xbf16, #tpu.memory_space<vmem>>, vector<1x256xbf16>
    %39 = vector.broadcast %38 : vector<1x256xbf16> to vector<8x256xbf16>
    %40 = arith.mulf %37, %39 : vector<8x256xbf16>
    %c40 = arith.constant 40 : index
    %c0_19 = arith.constant 0 : index
    %41 = vector.load %arg10[%c40, %c0_19] : memref<72x256xbf16, #tpu.memory_space<vmem>>, vector<8x256xbf16>
    tpu.vector_store %arg10[%c40, %c0_19], %40 {strides = array<i32>} : memref<72x256xbf16, #tpu.memory_space<vmem>>, vector<8x256xbf16>,
    %c241_i32 = arith.constant 241 : i32
    %42 = tpu.dynamic_rotate %9 by %c241_i32 dim 1 : vector<8x256xf32>, i32 -> vector<8x256xf32>
    %43 = arith.truncf %42 : vector<8x256xf32> to vector<8x256xbf16>
    %c6 = arith.constant 6 : index
    %c0_20 = arith.constant 0 : index
    %44 = vector.load %arg2[%c6, %c0_20] : memref<9x256xbf16, #tpu.memory_space<vmem>>, vector<1x256xbf16>
    %45 = vector.broadcast %44 : vector<1x256xbf16> to vector<8x256xbf16>
    %46 = arith.mulf %43, %45 : vector<8x256xbf16>
    %c48 = arith.constant 48 : index
    %c0_21 = arith.constant 0 : index
    %47 = vector.load %arg10[%c48, %c0_21] : memref<72x256xbf16, #tpu.memory_space<vmem>>, vector<8x256xbf16>
    tpu.vector_store %arg10[%c48, %c0_21], %46 {strides = array<i32>} : memref<72x256xbf16, #tpu.memory_space<vmem>>, vector<8x256xbf16>,
    %c240_i32 = arith.constant 240 : i32
    %48 = tpu.dynamic_rotate %9 by %c240_i32 dim 1 : vector<8x256xf32>, i32 -> vector<8x256xf32>
    %49 = arith.truncf %48 : vector<8x256xf32> to vector<8x256xbf16>
    %c7 = arith.constant 7 : index
    %c0_22 = arith.constant 0 : index
    %50 = vector.load %arg2[%c7, %c0_22] : memref<9x256xbf16, #tpu.memory_space<vmem>>, vector<1x256xbf16>
    %51 = vector.broadcast %50 : vector<1x256xbf16> to vector<8x256xbf16>
    %52 = arith.mulf %49, %51 : vector<8x256xbf16>
    %c56 = arith.constant 56 : index
    %c0_23 = arith.constant 0 : index
    %53 = vector.load %arg10[%c56, %c0_23] : memref<72x256xbf16, #tpu.memory_space<vmem>>, vector<8x256xbf16>
    tpu.vector_store %arg10[%c56, %c0_23], %52 {strides = array<i32>} : memref<72x256xbf16, #tpu.memory_space<vmem>>, vector<8x256xbf16>,
    %c239_i32 = arith.constant 239 : i32
    %54 = tpu.dynamic_rotate %9 by %c239_i32 dim 1 : vector<8x256xf32>, i32 -> vector<8x256xf32>
    %55 = arith.truncf %54 : vector<8x256xf32> to vector<8x256xbf16>
    %c8_24 = arith.constant 8 : index
    %c0_25 = arith.constant 0 : index
    %56 = vector.load %arg2[%c8_24, %c0_25] : memref<9x256xbf16, #tpu.memory_space<vmem>>, vector<1x256xbf16>
    %57 = vector.broadcast %56 : vector<1x256xbf16> to vector<8x256xbf16>
    %58 = arith.mulf %55, %57 : vector<8x256xbf16>
    %c64 = arith.constant 64 : index
    %c0_26 = arith.constant 0 : index
    %59 = vector.load %arg10[%c64, %c0_26] : memref<72x256xbf16, #tpu.memory_space<vmem>>, vector<8x256xbf16>
    tpu.vector_store %arg10[%c64, %c0_26], %58 {strides = array<i32>} : memref<72x256xbf16, #tpu.memory_space<vmem>>, vector<8x256xbf16>,
    %c0_27 = arith.constant 0 : index
    %c0_28 = arith.constant 0 : index
    %60 = vector.load %arg5[%c0_27, %c0_28] : memref<8x72xbf16, #tpu.memory_space<vmem>>, vector<8x72xbf16>
    %c0_29 = arith.constant 0 : index
    %c0_30 = arith.constant 0 : index
    %61 = vector.load %arg10[%c0_29, %c0_30] : memref<72x256xbf16, #tpu.memory_space<vmem>>, vector<72x256xbf16>
    %cst_31 = arith.constant dense<0.000000e+00> : vector<8x256xf32>
    %62 = tpu.matmul %60, %61, %cst_31 {dimension_numbers = #tpu.dot_dimension_numbers<[1], [0], [0], [1], [0, 0, 1, 1], [], []>} : vector<8x72xbf16>, vector<72x256xbf16>, vector<8x256xf32> -> vector<8x256xf32>
    %c0_32 = arith.constant 0 : index
    %c0_33 = arith.constant 0 : index
    %63 = vector.load %arg6[%c0_32, %c0_33] : memref<8x1xf32, #tpu.memory_space<vmem>>, vector<8x1xf32>
    %64 = vector.broadcast %63 : vector<8x1xf32> to vector<8x256xf32>
    %65 = arith.addf %62, %64 : vector<8x256xf32>
    %cst_34 = arith.constant 0.000000e+00 : f32
    %66 = vector.broadcast %cst_34 : f32 to vector<8x256xf32>
    %67 = arith.maximumf %65, %66 : vector<8x256xf32>
    %c0_35 = arith.constant 0 : index
    %c0_36 = arith.constant 0 : index
    %68 = vector.load %arg7[%c0_35, %c0_36] : memref<32x8xbf16, #tpu.memory_space<vmem>>, vector<32x8xbf16>
    %69 = arith.truncf %67 : vector<8x256xf32> to vector<8x256xbf16>
    %cst_37 = arith.constant dense<0.000000e+00> : vector<32x256xf32>
    %70 = tpu.matmul %68, %69, %cst_37 {dimension_numbers = #tpu.dot_dimension_numbers<[1], [0], [0], [1], [0, 0, 1, 1], [], []>} : vector<32x8xbf16>, vector<8x256xbf16>, vector<32x256xf32> -> vector<32x256xf32>
    %c0_38 = arith.constant 0 : index
    %c0_39 = arith.constant 0 : index
    %71 = vector.load %arg8[%c0_38, %c0_39] : memref<32x1xf32, #tpu.memory_space<vmem>>, vector<32x1xf32>
    %72 = vector.broadcast %71 : vector<32x1xf32> to vector<32x256xf32>
    %73 = arith.addf %70, %72 : vector<32x256xf32>
    %74 = vector.extract_strided_slice %73 {offsets = [0, 0], sizes = [16, 256], strides = [1, 1]} : vector<32x256xf32> to vector<16x256xf32>
    %75 = arith.addf %74, %1 : vector<16x256xf32>
    %c0_40 = arith.constant 0 : index
    %c0_41 = arith.constant 0 : index
    %c0_42 = arith.constant 0 : index
    %76 = vector.load %arg9[%c0_40, %c0_41, %c0_42] : memref<1x32x256xf32, #tpu.memory_space<vmem>>, vector<1x16x256xf32>
    %77 = vector.shape_cast %76 : vector<1x16x256xf32> to vector<16x256xf32>
    %78 = vector.shape_cast %75 : vector<16x256xf32> to vector<1x16x256xf32>
    tpu.vector_store %arg9[%c0_40, %c0_41, %c0_42], %78 {strides = array<i32>} : memref<1x32x256xf32, #tpu.memory_space<vmem>>, vector<1x16x256xf32>,
    %79 = vector.extract_strided_slice %73 {offsets = [16, 0], sizes = [16, 256], strides = [1, 1]} : vector<32x256xf32> to vector<16x256xf32>
    %c0_43 = arith.constant 0 : index
    %c16_44 = arith.constant 16 : index
    %c0_45 = arith.constant 0 : index
    %80 = vector.load %arg9[%c0_43, %c16_44, %c0_45] : memref<1x32x256xf32, #tpu.memory_space<vmem>>, vector<1x16x256xf32>
    %81 = vector.shape_cast %80 : vector<1x16x256xf32> to vector<16x256xf32>
    %82 = vector.shape_cast %79 : vector<16x256xf32> to vector<1x16x256xf32>
    tpu.vector_store %arg9[%c0_43, %c16_44, %c0_45], %82 {strides = array<i32>} : memref<1x32x256xf32, #tpu.memory_space<vmem>>, vector<1x16x256xf32>,
    return
  }
  func.func @transform_0(%arg0: i32) -> (i32, i32, i32) {
    %c0_i32 = arith.constant 0 : i32
    %c0_i32_0 = arith.constant 0 : i32
    %c0_i32_1 = arith.constant 0 : i32
    return %arg0, %c0_i32, %c0_i32_0 : i32, i32, i32
  }
  func.func @transform_1(%arg0: i32) -> (i32, i32) {
    %c0_i32 = arith.constant 0 : i32
    %c0_i32_0 = arith.constant 0 : i32
    %c0_i32_1 = arith.constant 0 : i32
    return %c0_i32, %c0_i32_0 : i32, i32
  }
  func.func @transform_2(%arg0: i32) -> (i32, i32) {
    %c0_i32 = arith.constant 0 : i32
    %c0_i32_0 = arith.constant 0 : i32
    %c0_i32_1 = arith.constant 0 : i32
    return %c0_i32, %c0_i32_0 : i32, i32
  }
  func.func @transform_3(%arg0: i32) -> (i32, i32) {
    %c0_i32 = arith.constant 0 : i32
    %c0_i32_0 = arith.constant 0 : i32
    %c0_i32_1 = arith.constant 0 : i32
    return %c0_i32, %c0_i32_0 : i32, i32
  }
  func.func @transform_4(%arg0: i32) -> (i32, i32) {
    %c0_i32 = arith.constant 0 : i32
    %c0_i32_0 = arith.constant 0 : i32
    %c0_i32_1 = arith.constant 0 : i32
    return %c0_i32, %c0_i32_0 : i32, i32
  }
  func.func @transform_5(%arg0: i32) -> (i32, i32) {
    %c0_i32 = arith.constant 0 : i32
    %c0_i32_0 = arith.constant 0 : i32
    %c0_i32_1 = arith.constant 0 : i32
    return %c0_i32, %c0_i32_0 : i32, i32
  }
  func.func @transform_6(%arg0: i32) -> (i32, i32) {
    %c0_i32 = arith.constant 0 : i32
    %c0_i32_0 = arith.constant 0 : i32
    %c0_i32_1 = arith.constant 0 : i32
    return %c0_i32, %c0_i32_0 : i32, i32
  }
  func.func @transform_7(%arg0: i32) -> (i32, i32) {
    %c0_i32 = arith.constant 0 : i32
    %c0_i32_0 = arith.constant 0 : i32
    %c0_i32_1 = arith.constant 0 : i32
    return %c0_i32, %c0_i32_0 : i32, i32
  }
  func.func @transform_8(%arg0: i32) -> (i32, i32, i32) {
    %c0_i32 = arith.constant 0 : i32
    %c0_i32_0 = arith.constant 0 : i32
    %c0_i32_1 = arith.constant 0 : i32
    return %arg0, %c0_i32, %c0_i32_0 : i32, i32, i32
  }
}

</mosaic_0001>

<llo_original>
// kernel: tpu_custom_call.1
$region0: #{tpu_custom_call.1}
  #allocation0 [shape = 'u32[]', space=smem, size = 0x4, offset = 0x4, fixed_abs, tag = 'smem constant byte address 0x4 - core index']
  #allocation1 [shape = 'u32[144,128]{1,0:T(1,128)}', space=vmem, size = 0x12000, scoped, tag = 'internal scratch']
  #allocation2 [shape = 'bf16[72,256]{1,0:T(8,128)(2,1)}', space=vmem, size = 0x9000, scoped, tag = 'scratch operand']
  %s0 = inlined_call_operand.vmem [shape: f32[2,16,256], index: 0, kind: input, shape index: {}]
  %s1 = inlined_call_operand.hbm [shape: bf16[9,256], index: 1, kind: input, shape index: {}]
  %s2 = inlined_call_operand.vmem [shape: bf16[8,16], index: 2, kind: input, shape index: {}]
  %s3 = inlined_call_operand.vmem [shape: f32[8,1], index: 3, kind: input, shape index: {}]
  %s4 = inlined_call_operand.vmem [shape: bf16[8,72], index: 4, kind: input, shape index: {}]
  %s5 = inlined_call_operand.vmem [shape: f32[8,1], index: 5, kind: input, shape index: {}]
  %s6 = inlined_call_operand.vmem [shape: bf16[32,8], index: 6, kind: input, shape index: {}]
  %s7 = inlined_call_operand.vmem [shape: f32[32,1], index: 7, kind: input, shape index: {}]
  %s8 = inlined_call_operand.hbm [shape: f32[2,32,256], index: 8, kind: output, shape index: {}]
  %s9 = sld [smem:[#allocation0]]
  $region69: #{tpu_custom_call.1} parent=0
    _
  %s11 = ssub.s32 1, %s9
  %s12 = scalar_select 0, %s11, %s9
  $region1: #{tpu_custom_call.1} parent=0
    #allocation3 [shape = 'u8[8192]{0}', space=vmem, size = 0x2000, scoped, tag = 'input window, operand 1, single buffered']
    #allocation4 [shape = 's32[2]{0}', space=sflag, size = 0x8, scoped, tag = 'scoped memory for tpu_custom_call.1']
    #allocation5 [shape = 's32[2]{0}', space=sflag, size = 0x8, scoped, tag = 'scoped memory for tpu_custom_call.1']
    #allocation6 [shape = 'u8[65536]{0}', space=vmem, size = 0x10000, scoped, tag = 'output window, operand 0']
    %13 = vsyncpa [#allocation4], 0
    %14 = vsyncpa [#allocation5], 0
    %s15 = scalar_lea.sflag [#allocation5], 1
    %16 = vsyncpa %s15, 0
    loop: start=0, step=1, limit=4
    $region2: #{tpu_custom_call.1} parent=1 // loop_pre_header
      _
    $region3: #{tpu_custom_call.1} parent=1 // loop_header
      %s18 = sphi 0, %s22
      %p19 = scmp.ge.s32.totalorder %s18, 4
      %s28 = sphi 0, %s30
      %s31 = sphi 0, %s28
      %s32 = sphi 0, %s31
      %s48 = sphi 0, %s32
      %s52 = sphi 0, %s52
      %s54 = sphi 0, %s52
      %s55 = sphi 0, %s54
      %s69 = sphi 0, %s55
      %s73 = sphi 0, %s73
      %s75 = sphi 0, %s73
      %s76 = sphi 0, %s75
      %s90 = sphi 0, %s76
      %s94 = sphi 0, %s94
      %s96 = sphi 0, %s94
      %s97 = sphi 0, %s96
      %s111 = sphi 0, %s97
      %s115 = sphi 0, %s115
      %s117 = sphi 0, %s115
      %s118 = sphi 0, %s117
      %s132 = sphi 0, %s118
      %s136 = sphi 0, %s136
      %s138 = sphi 0, %s136
      %s139 = sphi 0, %s138
      %s153 = sphi 0, %s139
      %s157 = sphi 0, %s157
      %s159 = sphi 0, %s157
      %s160 = sphi 0, %s159
      %s174 = sphi 0, %s160
      %s178 = sphi 0, %s178
      %s180 = sphi 0, %s178
      %s181 = sphi 0, %s180
      %s195 = sphi 0, %s181
      %s201 = sphi 0, %s203
      %s204 = sphi 0, %s201
      %s205 = sphi 0, %s204
      %s221 = sphi 0, %s205
    $region4: #{tpu_custom_call.1} parent=1 // loop_header_branch
      %21 = sbr.rel (%p19) target = $region8
    $region5: #{tpu_custom_call.1} parent=1 // loop_body
      %s23 = ssub.s32 %s18, 1
      %s24 = ssub.s32 %s18, 2
      %s25 = sadd.s32 %s18, 1
      %s26 = ssub.s32 %s18, %s25
      %p27 = scmp.eq.s32.totalorder %s26, 0
      %s29 = sadd.s32 %s28, 1
      %s30 = scalar_select %p27, %s28, %s29
      %p33 = pneg %p27
      %p34 = scmp.eq.s32.totalorder %s18, 1
      %p35 = por %p33, %p34
      %p36 = scmp.ne.s32.totalorder %s28, %s31
      %p37 = scmp.eq.s32.totalorder %s18, 0
      %p38 = por %p36, %p37
      %p39 = scmp.ne.s32.totalorder %s28, %s31
      %p40 = scmp.eq.s32.totalorder %s23, 1
      %p41 = por %p39, %p40
      %p42 = scmp.ne.s32.totalorder %s31, %s32
      %p43 = scmp.eq.s32.totalorder %s23, 0
      %p44 = por %p42, %p43
      %p45 = scmp.ne.s32.totalorder %s31, %s32
      %p46 = scmp.eq.s32.totalorder %s24, 1
      %p47 = por %p45, %p46
      %p49 = scmp.ne.s32.totalorder %s32, %s48
      %p50 = scmp.eq.s32.totalorder %s24, 0
      %p51 = por %p49, %p50
      %s53 = sadd.s32 %s52, 1
      %p56 = scmp.eq.s32.totalorder %s18, 1
      %p57 = scmp.ne.s32.totalorder %s52, %s54
      %p58 = scmp.eq.s32.totalorder %s18, 0
      %p59 = por %p57, %p58
      %p60 = scmp.ne.s32.totalorder %s52, %s54
      %p61 = scmp.eq.s32.totalorder %s23, 1
      %p62 = por %p60, %p61
      %p63 = scmp.ne.s32.totalorder %s54, %s55
      %p64 = scmp.eq.s32.totalorder %s23, 0
      %p65 = por %p63, %p64
      %p66 = scmp.ne.s32.totalorder %s54, %s55
      %p67 = scmp.eq.s32.totalorder %s24, 1
      %p68 = por %p66, %p67
      %p70 = scmp.ne.s32.totalorder %s55, %s69
      %p71 = scmp.eq.s32.totalorder %s24, 0
      %p72 = por %p70, %p71
      %s74 = sadd.s32 %s73, 1
      %p77 = scmp.eq.s32.totalorder %s18, 1
      %p78 = scmp.ne.s32.totalorder %s73, %s75
      %p79 = scmp.eq.s32.totalorder %s18, 0
      %p80 = por %p78, %p79
      %p81 = scmp.ne.s32.totalorder %s73, %s75
      %p82 = scmp.eq.s32.totalorder %s23, 1
      %p83 = por %p81, %p82
      %p84 = scmp.ne.s32.totalorder %s75, %s76
      %p85 = scmp.eq.s32.totalorder %s23, 0
      %p86 = por %p84, %p85
      %p87 = scmp.ne.s32.totalorder %s75, %s76
      %p88 = scmp.eq.s32.totalorder %s24, 1
      %p89 = por %p87, %p88
      %p91 = scmp.ne.s32.totalorder %s76, %s90
      %p92 = scmp.eq.s32.totalorder %s24, 0
      %p93 = por %p91, %p92
      %s95 = sadd.s32 %s94, 1
      %p98 = scmp.eq.s32.totalorder %s18, 1
      %p99 = scmp.ne.s32.totalorder %s94, %s96
      %p100 = scmp.eq.s32.totalorder %s18, 0
      %p101 = por %p99, %p100
      %p102 = scmp.ne.s32.totalorder %s94, %s96
      %p103 = scmp.eq.s32.totalorder %s23, 1
      %p104 = por %p102, %p103
      %p105 = scmp.ne.s32.totalorder %s96, %s97
      %p106 = scmp.eq.s32.totalorder %s23, 0
      %p107 = por %p105, %p106
      %p108 = scmp.ne.s32.totalorder %s96, %s97
      %p109 = scmp.eq.s32.totalorder %s24, 1
      %p110 = por %p108, %p109
      %p112 = scmp.ne.s32.totalorder %s97, %s111
      %p113 = scmp.eq.s32.totalorder %s24, 0
      %p114 = por %p112, %p113
      %s116 = sadd.s32 %s115, 1
      %p119 = scmp.eq.s32.totalorder %s18, 1
      %p120 = scmp.ne.s32.totalorder %s115, %s117
      %p121 = scmp.eq.s32.totalorder %s18, 0
      %p122 = por %p120, %p121
      %p123 = scmp.ne.s32.totalorder %s115, %s117
      %p124 = scmp.eq.s32.totalorder %s23, 1
      %p125 = por %p123, %p124
      %p126 = scmp.ne.s32.totalorder %s117, %s118
      %p127 = scmp.eq.s32.totalorder %s23, 0
      %p128 = por %p126, %p127
      %p129 = scmp.ne.s32.totalorder %s117, %s118
      %p130 = scmp.eq.s32.totalorder %s24, 1
      %p131 = por %p129, %p130
      %p133 = scmp.ne.s32.totalorder %s118, %s132
      %p134 = scmp.eq.s32.totalorder %s24, 0
      %p135 = por %p133, %p134
      %s137 = sadd.s32 %s136, 1
      %p140 = scmp.eq.s32.totalorder %s18, 1
      %p141 = scmp.ne.s32.totalorder %s136, %s138
      %p142 = scmp.eq.s32.totalorder %s18, 0
      %p143 = por %p141, %p142
      %p144 = scmp.ne.s32.totalorder %s136, %s138
      %p145 = scmp.eq.s32.totalorder %s23, 1
      %p146 = por %p144, %p145
      %p147 = scmp.ne.s32.totalorder %s138, %s139
      %p148 = scmp.eq.s32.totalorder %s23, 0
      %p149 = por %p147, %p148
      %p150 = scmp.ne.s32.totalorder %s138, %s139
      %p151 = scmp.eq.s32.totalorder %s24, 1
      %p152 = por %p150, %p151
      %p154 = scmp.ne.s32.totalorder %s139, %s153
      %p155 = scmp.eq.s32.totalorder %s24, 0
      %p156 = por %p154, %p155
      %s158 = sadd.s32 %s157, 1
      %p161 = scmp.eq.s32.totalorder %s18, 1
      %p162 = scmp.ne.s32.totalorder %s157, %s159
      %p163 = scmp.eq.s32.totalorder %s18, 0
      %p164 = por %p162, %p163
      %p165 = scmp.ne.s32.totalorder %s157, %s159
      %p166 = scmp.eq.s32.totalorder %s23, 1
      %p167 = por %p165, %p166
      %p168 = scmp.ne.s32.totalorder %s159, %s160
      %p169 = scmp.eq.s32.totalorder %s23, 0
      %p170 = por %p168, %p169
      %p171 = scmp.ne.s32.totalorder %s159, %s160
      %p172 = scmp.eq.s32.totalorder %s24, 1
      %p173 = por %p171, %p172
      %p175 = scmp.ne.s32.totalorder %s160, %s174
      %p176 = scmp.eq.s32.totalorder %s24, 0
      %p177 = por %p175, %p176
      %s179 = sadd.s32 %s178, 1
      %p182 = scmp.eq.s32.totalorder %s18, 1
      %p183 = scmp.ne.s32.totalorder %s178, %s180
      %p184 = scmp.eq.s32.totalorder %s18, 0
      %p185 = por %p183, %p184
      %p186 = scmp.ne.s32.totalorder %s178, %s180
      %p187 = scmp.eq.s32.totalorder %s23, 1
      %p188 = por %p186, %p187
      %p189 = scmp.ne.s32.totalorder %s180, %s181
      %p190 = scmp.eq.s32.totalorder %s23, 0
      %p191 = por %p189, %p190
      %p192 = scmp.ne.s32.totalorder %s180, %s181
      %p193 = scmp.eq.s32.totalorder %s24, 1
      %p194 = por %p192, %p193
      %p196 = scmp.ne.s32.totalorder %s181, %s195
      %p197 = scmp.eq.s32.totalorder %s24, 0
      %p198 = por %p196, %p197
      %s199 = ssub.s32 %s18, %s25
      %p200 = scmp.eq.s32.totalorder %s199, 0
      %s202 = sadd.s32 %s201, 1
      %s203 = scalar_select %p200, %s201, %s202
      %p206 = pneg %p200
      %p207 = scmp.eq.s32.totalorder %s18, 1
      %p208 = por %p206, %p207
      %p209 = scmp.ne.s32.totalorder %s201, %s204
      %p210 = scmp.eq.s32.totalorder %s18, 0
      %p211 = por %p209, %p210
      %p212 = scmp.ne.s32.totalorder %s201, %s204
      %p213 = scmp.eq.s32.totalorder %s23, 1
      %p214 = por %p212, %p213
      %p215 = scmp.ne.s32.totalorder %s204, %s205
      %p216 = scmp.eq.s32.totalorder %s23, 0
      %p217 = por %p215, %p216
      %p218 = scmp.ne.s32.totalorder %s204, %s205
      %p219 = scmp.eq.s32.totalorder %s24, 1
      %p220 = por %p218, %p219
      %p222 = scmp.ne.s32.totalorder %s205, %s221
      %p223 = scmp.eq.s32.totalorder %s24, 0
      %p224 = por %p222, %p223
      %p225 = scmp.le.s32.totalorder 1, %s18
      %p226 = scmp.lt.s32.totalorder %s18, 3
      %p227 = pnand %p225, %p226
      %p228 = pneg %p227
      // Predicated region
      $region9: #{tpu_custom_call.1} parent=5 // pred_check
        _
      $region10: #{tpu_custom_call.1} parent=5 // pred_check_branch
        %230 = sbr.rel (%p227) target = $region12
      $region11: #{tpu_custom_call.1} parent=5 // pred_region
        %s231 = ssub.s32 %s18, 1
        // Predicated region
        $region13: #{tpu_custom_call.1} parent=11 // pred_check
          %p232 = pneg %p65
        $region14: #{tpu_custom_call.1} parent=11 // pred_check_branch
          %234 = sbr.rel (%p232) target = $region16
        $region15: #{tpu_custom_call.1} parent=11 // pred_region
          %s236 = ssub.s32 256, 256
          %237 = vsyncadd [#allocation4], %s236
          %s238 = sshll.u32 [#allocation3], 4
          %s239 = int_to_ptr.vmem [resolvable:$true] %s238
          %244 = dma.hbm_to_vmem [thread:$0]  %s1, 256, %s239, [#allocation4], 128, 128, 8
        $region16: #{tpu_custom_call.1} parent=11 // pred_fallthru
          _
        // Predicated region
        $region17: #{tpu_custom_call.1} parent=11 // pred_check
          %p245 = pneg %p86
        $region18: #{tpu_custom_call.1} parent=11 // pred_check_branch
          %247 = sbr.rel (%p245) target = $region20
        $region19: #{tpu_custom_call.1} parent=11 // pred_region
          _
        $region20: #{tpu_custom_call.1} parent=11 // pred_fallthru
          _
        // Predicated region
        $region21: #{tpu_custom_call.1} parent=11 // pred_check
          %p248 = pneg %p107
        $region22: #{tpu_custom_call.1} parent=11 // pred_check_branch
          %250 = sbr.rel (%p248) target = $region24
        $region23: #{tpu_custom_call.1} parent=11 // pred_region
          _
        $region24: #{tpu_custom_call.1} parent=11 // pred_fallthru
          _
        // Predicated region
        $region25: #{tpu_custom_call.1} parent=11 // pred_check
          %p251 = pneg %p128
        $region26: #{tpu_custom_call.1} parent=11 // pred_check_branch
          %253 = sbr.rel (%p251) target = $region28
        $region27: #{tpu_custom_call.1} parent=11 // pred_region
          _
        $region28: #{tpu_custom_call.1} parent=11 // pred_fallthru
          _
        // Predicated region
        $region29: #{tpu_custom_call.1} parent=11 // pred_check
          %p254 = pneg %p149
        $region30: #{tpu_custom_call.1} parent=11 // pred_check_branch
          %256 = sbr.rel (%p254) target = $region32
        $region31: #{tpu_custom_call.1} parent=11 // pred_region
          _
        $region32: #{tpu_custom_call.1} parent=11 // pred_fallthru
          _
        // Predicated region
        $region33: #{tpu_custom_call.1} parent=11 // pred_check
          %p257 = pneg %p170
        $region34: #{tpu_custom_call.1} parent=11 // pred_check_branch
          %259 = sbr.rel (%p257) target = $region36
        $region35: #{tpu_custom_call.1} parent=11 // pred_region
          _
        $region36: #{tpu_custom_call.1} parent=11 // pred_fallthru
          _
        // Predicated region
        $region37: #{tpu_custom_call.1} parent=11 // pred_check
          %p260 = pneg %p191
        $region38: #{tpu_custom_call.1} parent=11 // pred_check_branch
          %262 = sbr.rel (%p260) target = $region40
        $region39: #{tpu_custom_call.1} parent=11 // pred_region
          _
        $region40: #{tpu_custom_call.1} parent=11 // pred_fallthru
          _
      $region12: #{tpu_custom_call.1} parent=5 // pred_fallthru
        _
      %p263 = scmp.lt.s32.totalorder %s18, 2
      // Predicated region
      $region41: #{tpu_custom_call.1} parent=5 // pred_check
        %p264 = pneg %p263
      $region42: #{tpu_custom_call.1} parent=5 // pred_check_branch
        %266 = sbr.rel (%p264) target = $region44
      $region43: #{tpu_custom_call.1} parent=5 // pred_region
        // Predicated region
        $region45: #{tpu_custom_call.1} parent=43 // pred_check
          %p267 = pneg %p38
        $region46: #{tpu_custom_call.1} parent=43 // pred_check_branch
          %269 = sbr.rel (%p267) target = $region48
        $region47: #{tpu_custom_call.1} parent=43 // pred_region
          %p270 = scmp.lt.s32.totalorder %s18, 1
          %s271 = scalar_select %p270, %s18, 1
          %s272 = smul.addr %s271, 4
          %s273 = smul.addr %s272, 8
          %s274 = scalar_lea.vmem %s0, %s273
        $region48: #{tpu_custom_call.1} parent=43 // pred_fallthru
          _
      $region44: #{tpu_custom_call.1} parent=5 // pred_fallthru
        _
      %p275 = scmp.le.s32.totalorder 1, %s18
      %p276 = scmp.lt.s32.totalorder %s18, 3
      %p277 = pnand %p275, %p276
      %p278 = pneg %p277
      // Predicated region
      $region49: #{tpu_custom_call.1} parent=5 // pred_check
        _
      $region50: #{tpu_custom_call.1} parent=5 // pred_check_branch
        %280 = sbr.rel (%p277) target = $region52
      $region51: #{tpu_custom_call.1} parent=5 // pred_region
        %s281 = ssub.s32 %s18, 1
        // Predicated region
        $region53: #{tpu_custom_call.1} parent=51 // pred_check
          %p282 = pneg %p65
        $region54: #{tpu_custom_call.1} parent=51 // pred_check_branch
          %284 = sbr.rel (%p282) target = $region56
        $region55: #{tpu_custom_call.1} parent=51 // pred_region
          %285 = dma.done [#allocation4], 256
        $region56: #{tpu_custom_call.1} parent=51 // pred_fallthru
          _
        %p286 = scmp.lt.s32.totalorder %s23, 1
        %s287 = scalar_select %p286, %s23, 1
        %s288 = smul.addr %s287, 4
        %s289 = smul.addr %s288, 8
        %s290 = scalar_lea.vmem %s0, %s289
        %p291 = pneg %p44
        %p292 = pneg %p41
        %p293 = pneg %p65
        %p294 = pneg %p62
        %p295 = pneg %p86
        %p296 = pneg %p83
        %p297 = pneg %p107
        %p298 = pneg %p104
        %p299 = pneg %p128
        %p300 = pneg %p125
        %p301 = pneg %p149
        %p302 = pneg %p146
        %p303 = pneg %p170
        %p304 = pneg %p167
        %p305 = pneg %p191
        %p306 = pneg %p188
        %p307 = pneg %p217
        %p308 = pneg %p214
        %s309 = sand.u32 %s204, 1
        %s310 = scalar_lea.sflag [#allocation5], %s309
        %s311 = sand.u32 %s204, 1
        %s312 = smul.addr %s311, 64
        %s313 = scalar_lea.vmem [#allocation6], %s312
        %p314 = scmp.lt.s32.totalorder %s23, 1
        %s315 = scalar_select %p314, %s23, 1
        %s316 = smul.addr %s315, 4
        %s317 = smul.addr %s316, 8
        %s318 = scalar_lea.vmem %s0, %s317
        %v320 = vld [vmem:[%s318] sm:$0xff]
        %v321 = vld [vmem:[%s318 + $0x8] sm:$0xff]
        %v322 = vld [vmem:[%s318 + $0x10] sm:$0xff]
        %v323 = vld [vmem:[%s318 + $0x18] sm:$0xff]
        %v324 = vpack.c.bf16 %v322, %v320
        %v325 = vpack.c.bf16 %v323, %v321
        %v326 = vld [vmem:[%s2] sm:$0xf]
        %v327 = vld [vmem:[%s3] sm:$0xff]
        %329 = vset.pattern.permute.xlu0 0
        %330 = vperm.xlu0 %329, %v327
        %v331 = vpop.permute.xlu0 %330
        %vm333 = vcmask 130048
        %v335 = vsel %vm333, %v326, 0
        %337 = vmatprep.subr.bf16.mxu0 %v325
        %338 = vmatpush1.bf16.msra.mxu0 %v324
        %339 = vmatprep.subr.bf16.mxu0 0
        %340 = vmatpush1.bf16.msra.mxu0 0
        %341 = vmatprep.subr.bf16.mxu0 0
        %342 = vmatpush1.bf16.msra.mxu0 0
        %343 = vmatprep.subr.bf16.mxu0 0
        %344 = vmatpush1.bf16.msra.mxu0 0
        %345 = vmatprep.subr.bf16.mxu0 0
        %346 = vmatpush1.bf16.msra.mxu0 0
        %347 = vmatprep.subr.bf16.mxu0 0
        %348 = vmatpush1.bf16.msra.mxu0 0
        %349 = vmatprep.subr.bf16.mxu0 0
        %350 = vmatpush1.bf16.msra.mxu0 0
        %351 = vmatprep.subr.bf16.mxu0 0
        %352 = vmatpush1.bf16.msra.mxu0 0
        %353 = vmatprep.subr.bf16.mxu0 0
        %354 = vmatpush1.bf16.msra.mxu0 0
        %355 = vmatprep.subr.bf16.mxu0 0
        %356 = vmatpush1.bf16.msra.mxu0 0
        %357 = vmatprep.subr.bf16.mxu0 0
        %358 = vmatpush1.bf16.msra.mxu0 0
        %359 = vmatprep.subr.bf16.mxu0 0
        %360 = vmatpush1.bf16.msra.mxu0 0
        %361 = vmatprep.subr.bf16.mxu0 0
        %362 = vmatpush1.bf16.msra.mxu0 0
        %363 = vmatprep.subr.bf16.mxu0 0
        %364 = vmatpush1.bf16.msra.mxu0 0
        %365 = vmatprep.subr.bf16.mxu0 0
        %366 = vmatpush1.bf16.msra.mxu0 0
        %367 = vmatprep.subr.bf16.mxu0 0
        %368 = vmatpush1.bf16.msra.mxu0 0
        %369 = vmatprep.mubr.bf16.mxu0 0
        %370 = vmatmul.mubr.bf16.gmra.mrb[0].mxu0 %v335
        %v371 = vpop.f32.mrb[0].mxu0
        %v372 = vadd.f32 %v331, %v371
        %v373 = vpop.f32.mrb[0].mxu0
        %v374 = vadd.f32 %v331, %v373
        %v375 = vpop.f32.mrb[0].mxu0
        %v376 = vpop.f32.mrb[0].mxu0
        %377 = vdwg.mxu0
        %v378 = vmax.f32 %v372, 0.0
        %v379 = vmax.f32 %v374, 0.0
        %v380 = vpack.c.bf16 %v378, %v378
        %v381 = vpack.c.bf16 %v379, %v379
        %382 = vrot.lane.b32.xlu0 %v378, 17
        %v383 = vpop.permute.xlu0 %382
        %384 = vrot.lane.b32.xlu0 %v379, 17
        %v385 = vpop.permute.xlu0 %384
        %v386 = vlaneseq
        %v387 = vand.u32 %v386, 127
        %vm388 = vcmp.lt.s32.totalorder %v387, 17
        %v389 = vsel %vm388, %v383, %v385
        %v390 = vsel %vm388, %v385, %v383
        %v391 = vpack.c.bf16 %v390, %v390
        %v392 = vpack.c.bf16 %v389, %v389
        %v393 = vld [vmem:[#allocation3] sm:$0x11]
        %v395 = vunpack.c.l.b16 %v393
        %v396 = vunpack.c.h.b16 %v393
        %v397 = vpack.c.b16 %v395, %v395
        %v398 = vpack.c.b16 %v396, %v396
        %v400 = vpack.i.b16 %v397, %v397
        %v402 = vlaneseq
        %v403 = vshrl.u32 %v402, 7
        %v404 = vsub.s32 0, %v403
        %v405 = vrot.slane %v400, %v404
        %v407 = vpack.i.b16 %v398, %v398
        %v409 = vlaneseq
        %v410 = vshrl.u32 %v409, 7
        %v411 = vsub.s32 0, %v410
        %v412 = vrot.slane %v407, %v411
        %v413 = vmul.bf16 %v391, %v405
        %v414 = vmul.bf16 %v392, %v412
        %v417 = vunpack.c.l.b16 %v413
        %v418 = vunpack.c.l.b16 %v414
        %v419 = vpack.c.b16 %v418, %v417
        %421 = vst [vmem:[#allocation2] sm:$0xff] %v419
        %422 = vrot.lane.b32.xlu0 %v378, 16
        %v423 = vpop.permute.xlu0 %422
        %424 = vrot.lane.b32.xlu0 %v379, 16
        %v425 = vpop.permute.xlu0 %424
        %vm426 = vcmp.lt.s32.totalorder %v387, 16
        %v427 = vsel %vm426, %v423, %v425
        %v428 = vsel %vm426, %v425, %v423
        %v429 = vpack.c.bf16 %v428, %v428
        %v430 = vpack.c.bf16 %v427, %v427
        %v431 = vld [vmem:[#allocation3] sm:$0x11]
        %v433 = vunpack.c.l.b16 %v431
        %v434 = vunpack.c.h.b16 %v431
        %v435 = vpack.c.b16 %v433, %v433
        %v436 = vpack.c.b16 %v434, %v434
        %v438 = vshrl.u32 %v435, 16
        %v439 = vpack.i.b16 %v438, %v438
        %v441 = vlaneseq
        %v442 = vshrl.u32 %v441, 7
        %v443 = vsub.s32 0, %v442
        %v444 = vrot.slane %v439, %v443
        %v446 = vshrl.u32 %v436, 16
        %v447 = vpack.i.b16 %v446, %v446
        %v449 = vlaneseq
        %v450 = vshrl.u32 %v449, 7
        %v451 = vsub.s32 0, %v450
        %v452 = vrot.slane %v447, %v451
        %v453 = vmul.bf16 %v429, %v444
        %v454 = vmul.bf16 %v430, %v452
        %v457 = vunpack.c.l.b16 %v453
        %v458 = vunpack.c.l.b16 %v454
        %v459 = vpack.c.b16 %v458, %v457
        %461 = vst [vmem:[#allocation2 + $0x8] sm:$0xff] %v459
        %462 = vrot.lane.b32.xlu0 %v378, 15
        %v463 = vpop.permute.xlu0 %462
        %464 = vrot.lane.b32.xlu0 %v379, 15
        %v465 = vpop.permute.xlu0 %464
        %vm466 = vcmp.lt.s32.totalorder %v387, 15
        %v467 = vsel %vm466, %v463, %v465
        %v468 = vsel %vm466, %v465, %v463
        %v469 = vpack.c.bf16 %v468, %v468
        %v470 = vpack.c.bf16 %v467, %v467
        %v471 = vld [vmem:[#allocation3] sm:$0x22]
        %v473 = vunpack.c.l.b16 %v471
        %v474 = vunpack.c.h.b16 %v471
        %v475 = vpack.c.b16 %v473, %v473
        %v476 = vpack.c.b16 %v474, %v474
        %v478 = vpack.i.b16 %v475, %v475
        %v480 = vlaneseq
        %v481 = vshrl.u32 %v480, 7
        %v482 = vsub.s32 1, %v481
        %v483 = vrot.slane %v478, %v482
        %v485 = vpack.i.b16 %v476, %v476
        %v487 = vlaneseq
        %v488 = vshrl.u32 %v487, 7
        %v489 = vsub.s32 1, %v488
        %v490 = vrot.slane %v485, %v489
        %v491 = vmul.bf16 %v469, %v483
        %v492 = vmul.bf16 %v470, %v490
        %v495 = vunpack.c.l.b16 %v491
        %v496 = vunpack.c.l.b16 %v492
        %v497 = vpack.c.b16 %v496, %v495
        %499 = vst [vmem:[#allocation2 + $0x10] sm:$0xff] %v497
        %500 = vrot.lane.b32.xlu0 %v378, 1
        %v501 = vpop.permute.xlu0 %500
        %502 = vrot.lane.b32.xlu0 %v379, 1
        %v503 = vpop.permute.xlu0 %502
        %vm504 = vcmp.lt.s32.totalorder %v387, 1
        %v505 = vsel %vm504, %v501, %v503
        %v506 = vsel %vm504, %v503, %v501
        %v507 = vpack.c.bf16 %v506, %v506
        %v508 = vpack.c.bf16 %v505, %v505
        %v509 = vld [vmem:[#allocation3] sm:$0x22]
        %v511 = vunpack.c.l.b16 %v509
        %v512 = vunpack.c.h.b16 %v509
        %v513 = vpack.c.b16 %v511, %v511
        %v514 = vpack.c.b16 %v512, %v512
        %v516 = vshrl.u32 %v513, 16
        %v517 = vpack.i.b16 %v516, %v516
        %v519 = vlaneseq
        %v520 = vshrl.u32 %v519, 7
        %v521 = vsub.s32 1, %v520
        %v522 = vrot.slane %v517, %v521
        %v524 = vshrl.u32 %v514, 16
        %v525 = vpack.i.b16 %v524, %v524
        %v527 = vlaneseq
        %v528 = vshrl.u32 %v527, 7
        %v529 = vsub.s32 1, %v528
        %v530 = vrot.slane %v525, %v529
        %v531 = vmul.bf16 %v507, %v522
        %v532 = vmul.bf16 %v508, %v530
        %v535 = vunpack.c.l.b16 %v531
        %v536 = vunpack.c.l.b16 %v532
        %v537 = vpack.c.b16 %v536, %v535
        %539 = vst [vmem:[#allocation2 + $0x18] sm:$0xff] %v537
        %v542 = vunpack.c.l.b16 %v380
        %v543 = vunpack.c.l.b16 %v381
        %v544 = vpack.c.b16 %v543, %v542
        %546 = vst [vmem:[#allocation2 + $0x20] sm:$0xff] %v544
        %547 = vrot.lane.b32.xlu0 %v378, 127
        %v548 = vpop.permute.xlu0 %547
        %549 = vrot.lane.b32.xlu0 %v379, 127
        %v550 = vpop.permute.xlu0 %549
        %vm551 = vcmp.lt.s32.totalorder %v387, 127
        %v552 = vsel %vm551, %v548, %v550
        %v553 = vsel %vm551, %v550, %v548
        %v554 = vpack.c.bf16 %v552, %v552
        %v555 = vpack.c.bf16 %v553, %v553
        %v556 = vld [vmem:[#allocation3] sm:$0x44]
        %v558 = vunpack.c.l.b16 %v556
        %v559 = vunpack.c.h.b16 %v556
        %v560 = vpack.c.b16 %v558, %v558
        %v561 = vpack.c.b16 %v559, %v559
        %v563 = vshrl.u32 %v560, 16
        %v564 = vpack.i.b16 %v563, %v563
        %v566 = vlaneseq
        %v567 = vshrl.u32 %v566, 7
        %v568 = vsub.s32 2, %v567
        %v569 = vrot.slane %v564, %v568
        %v571 = vshrl.u32 %v561, 16
        %v572 = vpack.i.b16 %v571, %v571
        %v574 = vlaneseq
        %v575 = vshrl.u32 %v574, 7
        %v576 = vsub.s32 2, %v575
        %v577 = vrot.slane %v572, %v576
        %v578 = vmul.bf16 %v554, %v569
        %v579 = vmul.bf16 %v555, %v577
        %v582 = vunpack.c.l.b16 %v578
        %v583 = vunpack.c.l.b16 %v579
        %v584 = vpack.c.b16 %v583, %v582
        %586 = vst [vmem:[#allocation2 + $0x28] sm:$0xff] %v584
        %587 = vrot.lane.b32.xlu0 %v378, 113
        %v588 = vpop.permute.xlu0 %587
        %589 = vrot.lane.b32.xlu0 %v379, 113
        %v590 = vpop.permute.xlu0 %589
        %vm591 = vcmp.lt.s32.totalorder %v387, 113
        %v592 = vsel %vm591, %v588, %v590
        %v593 = vsel %vm591, %v590, %v588
        %v594 = vpack.c.bf16 %v592, %v592
        %v595 = vpack.c.bf16 %v593, %v593
        %v596 = vld [vmem:[#allocation3] sm:$0x88]
        %v598 = vunpack.c.l.b16 %v596
        %v599 = vunpack.c.h.b16 %v596
        %v600 = vpack.c.b16 %v598, %v598
        %v601 = vpack.c.b16 %v599, %v599
        %v603 = vpack.i.b16 %v600, %v600
        %v605 = vlaneseq
        %v606 = vshrl.u32 %v605, 7
        %v607 = vsub.s32 3, %v606
        %v608 = vrot.slane %v603, %v607
        %v610 = vpack.i.b16 %v601, %v601
        %v612 = vlaneseq
        %v613 = vshrl.u32 %v612, 7
        %v614 = vsub.s32 3, %v613
        %v615 = vrot.slane %v610, %v614
        %v616 = vmul.bf16 %v594, %v608
        %v617 = vmul.bf16 %v595, %v615
        %v620 = vunpack.c.l.b16 %v616
        %v621 = vunpack.c.l.b16 %v617
        %v622 = vpack.c.b16 %v621, %v620
        %624 = vst [vmem:[#allocation2 + $0x30] sm:$0xff] %v622
        %625 = vrot.lane.b32.xlu0 %v378, 112
        %v626 = vpop.permute.xlu0 %625
        %627 = vrot.lane.b32.xlu0 %v379, 112
        %v628 = vpop.permute.xlu0 %627
        %vm629 = vcmp.lt.s32.totalorder %v387, 112
        %v630 = vsel %vm629, %v626, %v628
        %v631 = vsel %vm629, %v628, %v626
        %v632 = vpack.c.bf16 %v630, %v630
        %v633 = vpack.c.bf16 %v631, %v631
        %v634 = vld [vmem:[#allocation3] sm:$0x88]
        %v636 = vunpack.c.l.b16 %v634
        %v637 = vunpack.c.h.b16 %v634
        %v638 = vpack.c.b16 %v636, %v636
        %v639 = vpack.c.b16 %v637, %v637
        %v641 = vshrl.u32 %v638, 16
        %v642 = vpack.i.b16 %v641, %v641
        %v644 = vlaneseq
        %v645 = vshrl.u32 %v644, 7
        %v646 = vsub.s32 3, %v645
        %v647 = vrot.slane %v642, %v646
        %v649 = vshrl.u32 %v639, 16
        %v650 = vpack.i.b16 %v649, %v649
        %v652 = vlaneseq
        %v653 = vshrl.u32 %v652, 7
        %v654 = vsub.s32 3, %v653
        %v655 = vrot.slane %v650, %v654
        %v656 = vmul.bf16 %v632, %v647
        %v657 = vmul.bf16 %v633, %v655
        %v660 = vunpack.c.l.b16 %v656
        %v661 = vunpack.c.l.b16 %v657
        %v662 = vpack.c.b16 %v661, %v660
        %664 = vst [vmem:[#allocation2 + $0x38] sm:$0xff] %v662
        %665 = vrot.lane.b32.xlu0 %v378, 111
        %v666 = vpop.permute.xlu0 %665
        %667 = vrot.lane.b32.xlu0 %v379, 111
        %v668 = vpop.permute.xlu0 %667
        %vm669 = vcmp.lt.s32.totalorder %v387, 111
        %v670 = vsel %vm669, %v666, %v668
        %v671 = vsel %vm669, %v668, %v666
        %v672 = vpack.c.bf16 %v670, %v670
        %v673 = vpack.c.bf16 %v671, %v671
        %v674 = vld [vmem:[#allocation3 + $0x8] sm:$0x11]
        %v676 = vunpack.c.l.b16 %v674
        %v677 = vunpack.c.h.b16 %v674
        %v678 = vpack.c.b16 %v676, %v676
        %v679 = vpack.c.b16 %v677, %v677
        %v681 = vpack.i.b16 %v678, %v678
        %v683 = vlaneseq
        %v684 = vshrl.u32 %v683, 7
        %v685 = vsub.s32 0, %v684
        %v686 = vrot.slane %v681, %v685
        %v688 = vpack.i.b16 %v679, %v679
        %v690 = vlaneseq
        %v691 = vshrl.u32 %v690, 7
        %v692 = vsub.s32 0, %v691
        %v693 = vrot.slane %v688, %v692
        %v694 = vmul.bf16 %v672, %v686
        %v695 = vmul.bf16 %v673, %v693
        %v698 = vunpack.c.l.b16 %v694
        %v699 = vunpack.c.l.b16 %v695
        %v700 = vpack.c.b16 %v699, %v698
        %702 = vst [vmem:[#allocation2 + $0x40] sm:$0xff] %v700
        %v703 = vld [vmem:[%s4] sm:$0xf]
        %v704 = vld [vmem:[#allocation2] sm:$0xff]
        %v705 = vld [vmem:[#allocation2 + $0x8] sm:$0xff]
        %v706 = vld [vmem:[#allocation2 + $0x10] sm:$0xff]
        %v707 = vld [vmem:[#allocation2 + $0x18] sm:$0xff]
        %v708 = vld [vmem:[#allocation2 + $0x20] sm:$0xff]
        %v709 = vld [vmem:[#allocation2 + $0x28] sm:$0xff]
        %v710 = vld [vmem:[#allocation2 + $0x30] sm:$0xff]
        %v711 = vld [vmem:[#allocation2 + $0x38] sm:$0xff]
        %v712 = vld [vmem:[#allocation2 + $0x40] sm:$0xff]
        %v713 = vld [vmem:[%s5] sm:$0xff]
        %715 = vset.pattern.permute.xlu0 0
        %716 = vperm.xlu0 %715, %v713
        %v717 = vpop.permute.xlu0 %716
        %v728 = vunpack.c.l.b16 %v704
        %v729 = vunpack.c.h.b16 %v704
        %v730 = vunpack.c.l.b16 %v705
        %v731 = vunpack.c.h.b16 %v705
        %v732 = vunpack.c.l.b16 %v706
        %v733 = vunpack.c.h.b16 %v706
        %v734 = vunpack.c.l.b16 %v707
        %v735 = vunpack.c.h.b16 %v707
        %v736 = vunpack.c.l.b16 %v708
        %v737 = vunpack.c.h.b16 %v708
        %v738 = vunpack.c.l.b16 %v709
        %v739 = vunpack.c.h.b16 %v709
        %v740 = vunpack.c.l.b16 %v710
        %v741 = vunpack.c.h.b16 %v710
        %v742 = vunpack.c.l.b16 %v711
        %v743 = vunpack.c.h.b16 %v711
        %v744 = vunpack.c.l.b16 %v712
        %v745 = vunpack.c.h.b16 %v712
        %v746 = vpack.c.b16 %v730, %v728
        %v747 = vpack.c.b16 %v731, %v729
        %v748 = vpack.c.b16 %v734, %v732
        %v749 = vpack.c.b16 %v735, %v733
        %v750 = vpack.c.b16 %v738, %v736
        %v751 = vpack.c.b16 %v739, %v737
        %v752 = vpack.c.b16 %v742, %v740
        %v753 = vpack.c.b16 %v743, %v741
        %v754 = vpack.c.b16 %v744, %v744
        %v755 = vpack.c.b16 %v745, %v745
        %vm764 = vcmask 588800
        %v766 = vsel %vm764, %v703, 0
        %vm768 = vcmask 1043456
        %v770 = vsel %vm768, %v754, 0
        %v773 = vsel %vm768, %v755, 0
        %775 = vmatprep.subr.bf16.mxu0 %v747
        %776 = vmatpush1.bf16.msra.mxu0 %v746
        %777 = vmatprep.subr.bf16.mxu0 %v749
        %778 = vmatpush1.bf16.msra.mxu0 %v748
        %779 = vmatprep.subr.bf16.mxu0 %v751
        %780 = vmatpush1.bf16.msra.mxu0 %v750
        %781 = vmatprep.subr.bf16.mxu0 %v753
        %782 = vmatpush1.bf16.msra.mxu0 %v752
        %783 = vmatprep.subr.bf16.mxu0 %v773
        %784 = vmatpush1.bf16.msra.mxu0 %v770
        %785 = vmatprep.subr.bf16.mxu0 0
        %786 = vmatpush1.bf16.msra.mxu0 0
        %787 = vmatprep.subr.bf16.mxu0 0
        %788 = vmatpush1.bf16.msra.mxu0 0
        %789 = vmatprep.subr.bf16.mxu0 0
        %790 = vmatpush1.bf16.msra.mxu0 0
        %791 = vmatprep.subr.bf16.mxu0 0
        %792 = vmatpush1.bf16.msra.mxu0 0
        %793 = vmatprep.subr.bf16.mxu0 0
        %794 = vmatpush1.bf16.msra.mxu0 0
        %795 = vmatprep.subr.bf16.mxu0 0
        %796 = vmatpush1.bf16.msra.mxu0 0
        %797 = vmatprep.subr.bf16.mxu0 0
        %798 = vmatpush1.bf16.msra.mxu0 0
        %799 = vmatprep.subr.bf16.mxu0 0
        %800 = vmatpush1.bf16.msra.mxu0 0
        %801 = vmatprep.subr.bf16.mxu0 0
        %802 = vmatpush1.bf16.msra.mxu0 0
        %803 = vmatprep.subr.bf16.mxu0 0
        %804 = vmatpush1.bf16.msra.mxu0 0
        %805 = vmatprep.subr.bf16.mxu0 0
        %806 = vmatpush1.bf16.msra.mxu0 0
        %807 = vmatprep.mubr.bf16.mxu0 0
        %808 = vmatmul.mubr.bf16.gmra.mrb[0].mxu0 %v766
        %v809 = vpop.f32.mrb[0].mxu0
        %v810 = vadd.f32 %v717, %v809
        %v811 = vpop.f32.mrb[0].mxu0
        %v812 = vadd.f32 %v717, %v811
        %v813 = vpop.f32.mrb[0].mxu0
        %v814 = vpop.f32.mrb[0].mxu0
        %815 = vdwg.mxu0
        %v816 = vmax.f32 %v810, 0.0
        %v817 = vmax.f32 %v812, 0.0
        %v818 = vld [vmem:[%s6] sm:$0xf]
        %v819 = vld [vmem:[%s6 + $0x4] sm:$0xf]
        %v820 = vld [vmem:[%s6 + $0x8] sm:$0xf]
        %v821 = vld [vmem:[%s6 + $0xc] sm:$0xf]
        %v822 = vpack.c.bf16 %v816, %v816
        %v823 = vpack.c.bf16 %v817, %v817
        %v824 = vld [vmem:[%s7] sm:$0xff]
        %v825 = vld [vmem:[%s7 + $0x8] sm:$0xff]
        %v826 = vld [vmem:[%s7 + $0x10] sm:$0xff]
        %v827 = vld [vmem:[%s7 + $0x18] sm:$0xff]
        %829 = vset.pattern.permute.xlu0 0
        %830 = vperm.xlu0 %829, %v824
        %v831 = vpop.permute.xlu0 %830
        %834 = vset.pattern.permute.xlu0 0
        %835 = vperm.xlu0 %834, %v825
        %v836 = vpop.permute.xlu0 %835
        %839 = vset.pattern.permute.xlu0 0
        %840 = vperm.xlu0 %839, %v826
        %v841 = vpop.permute.xlu0 %840
        %844 = vset.pattern.permute.xlu0 0
        %845 = vperm.xlu0 %844, %v827
        %v846 = vpop.permute.xlu0 %845
        %v852 = vunpack.c.l.b16 %v818
        %v853 = vunpack.c.l.b16 %v819
        %v854 = vunpack.c.l.b16 %v820
        %v855 = vunpack.c.l.b16 %v821
        %v856 = vpack.c.b16 %v853, %v852
        %v857 = vpack.c.b16 %v855, %v854
        %vm858 = vcmask 64512
        %v860 = vsel %vm858, %v856, 0
        %v863 = vsel %vm858, %v857, 0
        %v866 = vsel %vm768, %v822, 0
        %v869 = vsel %vm768, %v823, 0
        %871 = vmatprep.subr.bf16.mxu0 %v869
        %872 = vmatpush1.bf16.msra.mxu0 %v866
        %873 = vmatprep.subr.bf16.mxu0 0
        %874 = vmatpush1.bf16.msra.mxu0 0
        %875 = vmatprep.subr.bf16.mxu0 0
        %876 = vmatpush1.bf16.msra.mxu0 0
        %877 = vmatprep.subr.bf16.mxu0 0
        %878 = vmatpush1.bf16.msra.mxu0 0
        %879 = vmatprep.subr.bf16.mxu0 0
        %880 = vmatpush1.bf16.msra.mxu0 0
        %881 = vmatprep.subr.bf16.mxu0 0
        %882 = vmatpush1.bf16.msra.mxu0 0
        %883 = vmatprep.subr.bf16.mxu0 0
        %884 = vmatpush1.bf16.msra.mxu0 0
        %885 = vmatprep.subr.bf16.mxu0 0
        %886 = vmatpush1.bf16.msra.mxu0 0
        %887 = vmatprep.subr.bf16.mxu0 0
        %888 = vmatpush1.bf16.msra.mxu0 0
        %889 = vmatprep.subr.bf16.mxu0 0
        %890 = vmatpush1.bf16.msra.mxu0 0
        %891 = vmatprep.subr.bf16.mxu0 0
        %892 = vmatpush1.bf16.msra.mxu0 0
        %893 = vmatprep.subr.bf16.mxu0 0
        %894 = vmatpush1.bf16.msra.mxu0 0
        %895 = vmatprep.subr.bf16.mxu0 0
        %896 = vmatpush1.bf16.msra.mxu0 0
        %897 = vmatprep.subr.bf16.mxu0 0
        %898 = vmatpush1.bf16.msra.mxu0 0
        %899 = vmatprep.subr.bf16.mxu0 0
        %900 = vmatpush1.bf16.msra.mxu0 0
        %901 = vmatprep.subr.bf16.mxu0 0
        %902 = vmatpush1.bf16.msra.mxu0 0
        %903 = vmatprep.mubr.bf16.mxu0 0
        %904 = vmatmul.mubr.bf16.gmra.mrb[0].mxu0 %v860
        %v905 = vpop.f32.mrb[0].mxu0
        %v906 = vadd.f32 %v831, %v905
        %v907 = vpop.f32.mrb[0].mxu0
        %v908 = vadd.f32 %v831, %v907
        %v909 = vpop.f32.mrb[0].mxu0
        %v910 = vadd.f32 %v836, %v909
        %v911 = vpop.f32.mrb[0].mxu0
        %v912 = vadd.f32 %v836, %v911
        %913 = vmatprep.mubr.bf16.mxu0 0
        %914 = vmatmul.mubr.bf16.gmra.mrb[0].mxu0 %v863
        %v915 = vpop.f32.mrb[0].mxu0
        %v916 = vadd.f32 %v841, %v915
        %v917 = vpop.f32.mrb[0].mxu0
        %v918 = vadd.f32 %v841, %v917
        %v919 = vpop.f32.mrb[0].mxu0
        %v920 = vadd.f32 %v846, %v919
        %v921 = vpop.f32.mrb[0].mxu0
        %v922 = vadd.f32 %v846, %v921
        %923 = vdwg.mxu0
        %v924 = vadd.f32 %v906, %v320
        %v925 = vadd.f32 %v908, %v321
        %v926 = vadd.f32 %v910, %v322
        %v927 = vadd.f32 %v912, %v323
        %928 = vst [vmem:[%s313] sm:$0xff] %v924
        %929 = vst [vmem:[%s313 + $0x8] sm:$0xff] %v925
        %930 = vst [vmem:[%s313 + $0x10] sm:$0xff] %v926
        %931 = vst [vmem:[%s313 + $0x18] sm:$0xff] %v927
        %932 = vst [vmem:[%s313 + $0x20] sm:$0xff] %v916
        %933 = vst [vmem:[%s313 + $0x28] sm:$0xff] %v918
        %934 = vst [vmem:[%s313 + $0x30] sm:$0xff] %v920
        %935 = vst [vmem:[%s313 + $0x38] sm:$0xff] %v922
        %s936 = sand.u32 %s204, 1
        %s937 = scalar_lea.sflag [#allocation5], %s936
        %s938 = sand.u32 %s204, 1
        %s939 = smul.addr %s938, 64
        %s940 = scalar_lea.vmem [#allocation6], %s939
        // Predicated region
        $region57: #{tpu_custom_call.1} parent=51 // pred_check
          %p941 = pneg %p214
        $region58: #{tpu_custom_call.1} parent=51 // pred_check_branch
          %943 = sbr.rel (%p941) target = $region60
        $region59: #{tpu_custom_call.1} parent=51 // pred_region
          %s945 = ssub.s32 1024, 1024
          %946 = vsyncadd %s937, %s945
          %s947 = smul.addr %s23, 8
          %s948 = smul.addr %s947, 128
          %s949 = scalar_lea.hbm %s8, %s948
          %s950 = sshll.u32 %s940, 4
          %s951 = int_to_ptr.vmem [resolvable:$true] %s950
          %956 = dma.vmem_to_hbm [thread:$0]  %s951, 1024, %s949, %s937, 256, 256, 16
        $region60: #{tpu_custom_call.1} parent=51 // pred_fallthru
          _
      $region52: #{tpu_custom_call.1} parent=5 // pred_fallthru
        _
      %p957 = scmp.le.s32.totalorder 2, %s18
      // Predicated region
      $region61: #{tpu_custom_call.1} parent=5 // pred_check
        %p958 = pneg %p957
      $region62: #{tpu_custom_call.1} parent=5 // pred_check_branch
        %960 = sbr.rel (%p958) target = $region64
      $region63: #{tpu_custom_call.1} parent=5 // pred_region
        %s961 = ssub.s32 %s18, 2
        // Predicated region
        $region65: #{tpu_custom_call.1} parent=63 // pred_check
          %p962 = pneg %p220
        $region66: #{tpu_custom_call.1} parent=63 // pred_check_branch
          %964 = sbr.rel (%p962) target = $region68
        $region67: #{tpu_custom_call.1} parent=63 // pred_region
          %s965 = sand.u32 %s205, 1
          %s966 = scalar_lea.sflag [#allocation5], %s965
          %s967 = sand.u32 %s205, 1
          %s968 = smul.addr %s967, 64
          %s969 = scalar_lea.vmem [#allocation6], %s968
          %970 = dma.done %s966, 1024
        $region68: #{tpu_custom_call.1} parent=63 // pred_fallthru
          _
      $region64: #{tpu_custom_call.1} parent=5 // pred_fallthru
        _
    $region6: #{tpu_custom_call.1} parent=1 // loop_footer
      %s22 = sadd.s32 1, %s18
    $region7: #{tpu_custom_call.1} parent=1 // loop_footer_branch
      %17 = sbr.rel target = $region3
    $region8: #{tpu_custom_call.1} parent=1 // loop_exit
      _
    %971 = vsyncpa [#allocation4], 1
    %s972 = scalar_lea.sflag [#allocation4], 1
    %973 = vsyncpa %s972, 1
    %974 = vsyncpa [#allocation5], 1
    %s975 = scalar_lea.sflag [#allocation5], 1
    %976 = vsyncpa %s975, 1

</llo_original>
